<compile_context>
chip_gen: v5e
topology: v5e:2x2
jax: 0.10.0
libtpu: 0.0.40
codegen_flags: <defaults>
</compile_context>

<pallas_src>
import math
import numpy as np
import jax
import jax.numpy as jnp
from jax.experimental import pallas as pl
from jax.experimental.pallas import tpu as pltpu


# ------------------------------------------------------------------ utilities
def _ceil_to(v, m):
    return max(((v + m - 1) // m) * m, m)


_PARALLEL_1D = pltpu.CompilerParams(dimension_semantics=("parallel",))
_SCATTER_PARAMS = pltpu.CompilerParams(
    dimension_semantics=("parallel", "arbitrary"))


# --------------------------------------------------------------- kernel 1: fitness
def _fitness_kernel(w_ref, x_ref, o_ref):
    # w_ref: (8, Cp) already scaled by 1/||w|| on host; x_ref: (tn, Cp)
    s = jax.lax.dot_general(w_ref[...], x_ref[...],
                            dimension_numbers=(((1,), (1,)), ((), ())),
                            preferred_element_type=jnp.float32)   # (8, tn)
    o_ref[...] = jnp.tanh(s)


def fitness_pallas(weights, x):
    """tanh((x @ w_l.T) / ||w_l||) for every weight row l -> (L, N) lane-dense."""
    weights = np.asarray(weights, np.float32)              # (L, C)
    x = np.asarray(x, np.float32)                          # (N, C)
    L, C = weights.shape
    N = x.shape[0]
    Cp = _ceil_to(C, 128)
    tn = min(_ceil_to(N, 128), 1024)
    Np = _ceil_to(N, tn)
    # fold 1/||w|| into the uploaded weight rows (eps guards zero weights)
    norm = np.maximum(np.linalg.norm(weights, axis=-1, keepdims=True), 1e-12)
    wp = np.zeros((8, Cp), np.float32)
    wp[:L, :C] = weights / norm
    xp = np.zeros((Np, Cp), np.float32)
    xp[:N, :C] = x                                          # no transpose pass
    out = pl.pallas_call(
        _fitness_kernel,
        out_shape=jax.ShapeDtypeStruct((8, Np), jnp.float32),
        grid=(Np // tn,),
        in_specs=[pl.BlockSpec((8, Cp), lambda n: (0, 0)),
                  pl.BlockSpec((tn, Cp), lambda n: (n, 0))],
        out_specs=pl.BlockSpec((8, tn), lambda n: (0, n)),
        compiler_params=_PARALLEL_1D,
    )(jnp.asarray(wp), jnp.asarray(xp))
    return np.asarray(out[:L, :N])


# --------------------------------- kernel 2: masked pairwise distance + fused argmin
def _pairdist_argmin_kernel(xq_ref, yk_ref, o_ref):
    xq = xq_ref[...]                                       # (Mp, 128): cols 0..3 = x,y,fit,group
    yk = yk_ref[...]                                       # (8,  tn) : rows 0..3 = x,y,fit,group
    x0, x1, x2, xg = xq[:, 0:1], xq[:, 1:2], xq[:, 2:3], xq[:, 3:4]
    y0, y1, y2, yg = yk[0:1, :], yk[1:2, :], yk[2:3, :], yk[3:4, :]
    d0 = x0 - y0
    d1 = x1 - y1
    dist = jnp.sqrt(d0 * d0 + d1 * d1) + jnp.abs(x2 - y2)   # |fit diff|, exact
    dist = jnp.where(xg == yg, dist, jnp.float32(1e30))     # cross-group mask
    # fused argmin over the (fully-resident) threshold/sublane axis
    dmin = jnp.min(dist, axis=0, keepdims=True)              # (1, tn)
    rid = jax.lax.broadcasted_iota(jnp.int32, dist.shape, 0)
    cand = jnp.where(dist == dmin, rid, jnp.int32(2 ** 30))
    o_ref[...] = jnp.min(cand, axis=0, keepdims=True)        # (1, tn) int32


def pairwise_argmin_pallas(x_rows, y_rows):
    """For every y row: index of the nearest x row (same group only).
    x_rows/y_rows: (M,4)/(Nn,4) = [x, y, fitness, group_id]."""
    x_rows = np.asarray(x_rows, np.float32)
    y_rows = np.asarray(y_rows, np.float32)
    M, Nn = x_rows.shape[0], y_rows.shape[0]
    Mp = _ceil_to(M, 8)
    tn = min(_ceil_to(Nn, 128), 1024)
    Np = _ceil_to(Nn, tn)
    xq = np.zeros((Mp, 128), np.float32)
    xq[:M, :4] = x_rows
    xq[M:, 3] = -1.0                                       # padded thresholds match nothing
    yk = np.zeros((8, Np), np.float32)
    yk[:4, :Nn] = y_rows.T
    yk[3, Nn:] = -2.0                                      # padded nodes match nothing
    out = pl.pallas_call(
        _pairdist_argmin_kernel,
        out_shape=jax.ShapeDtypeStruct((1, Np), jnp.int32),
        grid=(Np // tn,),
        in_specs=[pl.BlockSpec((Mp, 128), lambda n: (0, 0)),
                  pl.BlockSpec((8, tn), lambda n: (0, n))],
        out_specs=pl.BlockSpec((1, tn), lambda n: (0, n)),
        compiler_params=_PARALLEL_1D,
    )(jnp.asarray(xq), jnp.asarray(yk))
    return np.asarray(out[0, :Nn])


# --------------------------------------------------------- kernel 3: scatter mean
def _scatter_mean_kernel(cl_ref, inv_ref, v_ref, o_ref, acc_ref):
    m = pl.program_id(1)

    @pl.when(m == 0)
    def _init():
        acc_ref[...] = jnp.zeros_like(acc_ref)

    tk = acc_ref.shape[0]
    tn = v_ref.shape[0]
    row_ids = (jax.lax.broadcasted_iota(jnp.int32, (tk, tn), 0)
               + pl.program_id(0) * tk)
    onehot = (row_ids == cl_ref[...]).astype(jnp.float32)          # built in-kernel
    acc_ref[...] += jnp.dot(onehot, v_ref[...],
                            preferred_element_type=jnp.float32)

    @pl.when(m == pl.num_programs(1) - 1)
    def _fin():
        # counts were computed on the host; only a broadcast multiply here
        o_ref[...] = acc_ref[...] * inv_ref[...]


def scatter_mean_pallas(values, index, dim_size):
    """torch_scatter scatter(..., reduce='mean') along dim 0 (empty bins -> 0)."""
    values = np.asarray(values, np.float32)
    index = np.asarray(index, np.int64)
    n, D = values.shape
    K = int(dim_size)
    tk = min(_ceil_to(K, 8), 1024)         # single K tile for K <= 1024
    tn = min(_ceil_to(n, 128), 1024)
    Kp, npad, Dp = _ceil_to(K, tk), _ceil_to(n, tn), _ceil_to(D, 128)
    idx_p = np.full((1, npad), -1, np.int32)
    idx_p[0, :n] = index
    cnt = np.bincount(index, minlength=K).astype(np.float32)
    inv = np.zeros((Kp, 1), np.float32)
    inv[:K, 0] = 1.0 / np.maximum(cnt[:K], 1.0)
    vp = np.zeros((npad, Dp), np.float32)
    vp[:n, :D] = values
    out = pl.pallas_call(
        _scatter_mean_kernel,
        out_shape=jax.ShapeDtypeStruct((Kp, Dp), jnp.float32),
        grid_spec=pltpu.PrefetchScalarGridSpec(
            num_scalar_prefetch=0, grid=(Kp // tk, npad // tn),
            in_specs=[pl.BlockSpec((1, tn), lambda k, m: (0, m)),
                      pl.BlockSpec((tk, 1), lambda k, m: (k, 0)),
                      pl.BlockSpec((tn, Dp), lambda k, m: (m, 0))],
            out_specs=pl.BlockSpec((tk, Dp), lambda k, m: (k, 0)),
            scratch_shapes=[pltpu.VMEM((tk, Dp), jnp.float32)]),
        compiler_params=_SCATTER_PARAMS,
    )(jnp.asarray(idx_p), jnp.asarray(inv), jnp.asarray(vp))
    return np.asarray(out[:K, :D])


# ------------------------------------------------- pooled adjacency (host, O(E))
def pooled_edges_host(edge_index, cluster):
    """np.where(P @ A @ P^T != 0) == unique (cluster[src], cluster[dst]) pairs,
    in the same row-major order."""
    cr = cluster[edge_index[0]]
    cc = cluster[edge_index[1]]
    pairs = np.unique(np.stack([cr, cc], axis=1), axis=0)   # lexicographic sort
    return pairs.T.astype(np.int64)


# ------------------------------------------------------------------ IHPool forward
def ihpool_forward(weight_1, weight_2, x, edge_index, node_type, tree,
                   x_y_index, ratio=0.1):
    """Mirrors IHPool.forward (select='inter', dis='ou', GNN=None)."""
    x = np.asarray(x, dtype=np.float32)
    node_type = np.asarray(node_type)
    tree = np.asarray(tree)
    x_y_index = np.asarray(x_y_index, dtype=np.float32)
    edge_index = np.asarray(edge_index)

    N = x.shape[0]
    if x.ndim == 1:
        x = x[:, None]
    idx1 = np.where(node_type == 1)[0]
    idx2 = np.where(node_type == 2)[0]
    N_1, N_2 = len(idx1), len(idx2)

    # add_remaining_self_loops (fill_value=1); edge_weight stays None
    keep = edge_index[0] != edge_index[1]
    loops = np.stack([np.arange(N), np.arange(N)])
    edge_index = np.concatenate([edge_index[:, keep], loops], axis=1)
    edge_weight = None

    # ---- fitness for BOTH levels in one lane-dense Pallas call -------------
    w_both = np.concatenate([np.asarray(weight_1, np.float32),
                             np.asarray(weight_2, np.float32)], 0)     # (2, C)
    fit_all = fitness_pallas(w_both, x)                                # (2, N)
    fitness_1 = fit_all[0, idx1]
    fitness_2 = fit_all[1, idx2]

    # ---- level-1 clustering --------------------------------------------------
    x_y_fitness_1 = np.concatenate([x_y_index[idx1], fitness_1[:, None]], -1)
    sort_idx1 = np.argsort(fitness_1, kind="stable")
    step1 = int(math.ceil(np.float32(N_1 / (N_1 * ratio))))            # ratio < 1
    thr_idx_1 = sort_idx1[np.arange(0, N_1, step1)]
    thr1 = x_y_fitness_1[thr_idx_1]
    thr1g = np.concatenate([thr1, np.zeros((thr1.shape[0], 1), np.float32)], 1)
    nod1g = np.concatenate([x_y_fitness_1, np.zeros((N_1, 1), np.float32)], 1)
    cluster_1 = pairwise_argmin_pallas(thr1g, nod1g).astype(np.int64)

    new_x_y_index_1 = scatter_mean_pallas(x_y_index[idx1], cluster_1,
                                          int(cluster_1.max()) + 1)
    new_x_y_index = np.concatenate(
        [np.zeros((1, 2), dtype=np.float32), new_x_y_index_1], 0)

    # ---- level-2: ALL parent groups batched into one distance + one scatter --
    x_y_fitness_2 = np.concatenate([x_y_index[idx2], fitness_2[:, None]], -1)
    x_y_index_2 = x_y_index[idx2]
    cluster2_from_1 = cluster_1[tree[idx2] - tree[idx2].min()]

    sorted_c1 = sorted(set(cluster_1.tolist()))
    n_c1 = len(sorted_c1)

    thr_rows, thr_counts, group_sel = [], [], []
    node_gid = np.full(N_2, -1, dtype=np.int64)
    for k in range(n_c1):
        sel = np.where(cluster2_from_1 == sorted_c1[k])[0]
        group_sel.append(sel)
        node_gid[sel] = k
        N_k = len(sel)
        # TODO(synk): an empty parent group divides by zero exactly like the reference.
        fit_k = fitness_2[sel]
        sort_k = np.argsort(fit_k, kind="stable")
        step_k = int(math.ceil(np.float32(N_k / (N_k * ratio))))       # ratio < 1
        thr_local = sort_k[np.arange(0, N_k, step_k)]
        t = x_y_fitness_2[sel][thr_local]
        thr_rows.append(np.concatenate(
            [t, np.full((t.shape[0], 1), k, np.float32)], 1))
        thr_counts.append(t.shape[0])

    thr_all = np.concatenate(thr_rows, 0)
    thr_off = np.zeros(n_c1, np.int64)
    thr_off[1:] = np.cumsum(thr_counts)[:-1]
    nod2g = np.concatenate([x_y_fitness_2,
                            node_gid[:, None].astype(np.float32)], 1)

    glob_min = pairwise_argmin_pallas(thr_all, nod2g).astype(np.int64)
    local_c2 = glob_min - thr_off[node_gid]          # per-node local cluster id

    dim_sizes = np.array([int(local_c2[group_sel[k]].max()) + 1
                          for k in range(n_c1)], dtype=np.int64)
    xy_off = np.zeros(n_c1, np.int64)
    xy_off[1:] = np.cumsum(dim_sizes)[:-1]
    K2 = int(dim_sizes.sum())
    global_lbl2 = local_c2 + xy_off[node_gid]
    new_x_y_index_2 = scatter_mean_pallas(x_y_index_2, global_lbl2, K2)
    new_x_y_index = np.concatenate([new_x_y_index, new_x_y_index_2], 0)

    # sequential label bookkeeping (host only; mirrors the reference quirks)
    cluster_2 = np.zeros(N_2, dtype=np.int64)
    new_tree = np.concatenate([np.array([-1], dtype=np.int64),
                               np.zeros(n_c1, dtype=np.int64)])
    for k in range(n_c1):
        t_cluster_2 = local_c2[group_sel[k]] + len(set(cluster_2.tolist())) * 2
        # NOTE: write mask uses `== k` (not sorted_c1[k]) exactly as the reference.
        cluster_2[np.where(cluster2_from_1 == k)[0]] = t_cluster_2
        new_tree = np.concatenate(
            [new_tree,
             np.full(len(set(t_cluster_2.tolist())), k + 1, dtype=np.int64)])

    # ---- global cluster relabeling -----------------------------------------
    cluster = np.arange(N, dtype=np.int64)
    cluster[node_type == 0] = 0
    cluster[node_type == 1] = cluster_1 + 1
    cluster[node_type == 2] = cluster_2 + len(cluster_1) + 100
    sorted_unique = np.array(sorted(set(cluster.tolist())), dtype=np.int64)
    cluster = np.searchsorted(sorted_unique, cluster)

    node_type_new = np.concatenate(
        [np.array([0], dtype=np.int64),
         np.ones(n_c1, dtype=np.int64),
         np.full(len(set(cluster_2.tolist())), 2, dtype=np.int64)])

    K = int(cluster.max()) + 1
    new_x = scatter_mean_pallas(x, cluster, K)                         # (K, C)

    # ---- pooled adjacency: O(E) gather + dedup (replaces dense P@A@P^T) ------
    new_edge_index = pooled_edges_host(edge_index, cluster)
    batch = np.zeros(new_x.shape[0], dtype=np.int64)
    fitness = np.concatenate(
        [np.zeros(1, dtype=np.float32), fitness_1, fitness_2])

    return (new_x, new_edge_index, edge_weight, batch, cluster,
            node_type_new, new_tree, fitness, new_x_y_index)


# ------------------------------------------------------------------------ main
if __name__ == "__main__":
    # NOTE: IHPool.__init__ also builds lin/att/gnn_score (LEConv) layers, but
    # they are never used in forward(), so only weight_1/weight_2 are created.
    # TODO(synk): GNN=None path only (gnn_intra_cluster not instantiated).
    C = 32
    N1, N2 = 12, 24
    N = 1 + N1 + N2

    key = jax.random.PRNGKey(0)
    k1, k2, k3, k4 = jax.random.split(key, 4)
    bound = 1.0 / math.sqrt(C)
    weight_1 = jax.random.uniform(k1, (1, C), minval=-bound, maxval=bound,
                                  dtype=jnp.float32)
    weight_2 = jax.random.uniform(k2, (1, C), minval=-bound, maxval=bound,
                                  dtype=jnp.float32)

    x = jax.random.normal(k3, (N, C), dtype=jnp.float32)
    x_y_index = jax.random.uniform(k4, (N, 2), minval=0.0, maxval=10.0,
                                   dtype=jnp.float32)

    node_type = np.array([0] + [1] * N1 + [2] * N2, dtype=np.int64)
    tree = np.zeros(N, dtype=np.int64)
    tree[0] = -1
    for j in range(N2):
        tree[1 + N1 + j] = 1 + (j % N1)      # global index of level-1 parent

    edges = []
    for i in range(N1):
        edges.append((0, 1 + i)); edges.append((1 + i, 0))
    for j in range(N2):
        p = 1 + (j % N1); c = 1 + N1 + j
        edges.append((p, c)); edges.append((c, p))
    edge_index = np.array(edges, dtype=np.int64).T   # (2, 72)

    out = ihpool_forward(weight_1, weight_2, np.asarray(x), edge_index,
                         node_type, tree, np.asarray(x_y_index), ratio=0.1)

    (new_x, new_edge_index, edge_weight, batch, cluster, node_type_new,
     new_tree, fitness, new_x_y_index) = out
    jax.block_until_ready(jnp.asarray(new_x))
    jax.block_until_ready(jnp.asarray(fitness))
    print("KERNEL_OK")
</pallas_src>

<mosaic_0001>
module attributes {stable_mosaic.version = 11 : i64} {
  func.func @_fitness_kernel(%arg0: i32, %arg1: memref<8x128xf32, #tpu.memory_space<vmem>>, %arg2: memref<128x128xf32, #tpu.memory_space<vmem>>, %arg3: memref<8x128xf32, #tpu.memory_space<vmem>>) attributes {dimension_semantics = [#tpu.dimension_semantics<parallel>], iteration_bounds = array<i64: 1>, scalar_prefetch = 0 : i64, scratch_operands = 0 : i64, tpu.core_type = #tpu.core_type<tc>, window_params = [{pipeline_mode = #tpu.pipeline_mode<synchronous>, transform_indices = @transform_0, window_bounds = array<i64: 8, 128>}, {transform_indices = @transform_1, window_bounds = array<i64: 128, 128>}, {transform_indices = @transform_2, window_bounds = array<i64: 8, 128>}]} {
    %c0 = arith.constant 0 : index
    %c0_0 = arith.constant 0 : index
    %0 = vector.load %arg1[%c0, %c0_0] : memref<8x128xf32, #tpu.memory_space<vmem>>, vector<8x128xf32>
    %c0_1 = arith.constant 0 : index
    %c0_2 = arith.constant 0 : index
    %1 = vector.load %arg2[%c0_1, %c0_2] : memref<128x128xf32, #tpu.memory_space<vmem>>, vector<128x128xf32>
    %cst = arith.constant dense<0.000000e+00> : vector<8x128xf32>
    %2 = tpu.matmul %0, %1, %cst {dimension_numbers = #tpu.dot_dimension_numbers<[1], [1], [0], [0], [0, 0, 1, 0], [], []>} : vector<8x128xf32>, vector<128x128xf32>, vector<8x128xf32> -> vector<8x128xf32>
    %3 = math.tanh %2 : vector<8x128xf32>
    %c0_3 = arith.constant 0 : index
    %c0_4 = arith.constant 0 : index
    %4 = vector.load %arg3[%c0_3, %c0_4] : memref<8x128xf32, #tpu.memory_space<vmem>>, vector<8x128xf32>
    tpu.vector_store %arg3[%c0_3, %c0_4], %3 {strides = array<i32>} : memref<8x128xf32, #tpu.memory_space<vmem>>, vector<8x128xf32>,
    return
  }
  func.func @transform_0(%arg0: i32) -> (i32, i32) {
    %c0_i32 = arith.constant 0 : i32
    %c0_i32_0 = arith.constant 0 : i32
    %c0_i32_1 = arith.constant 0 : i32
    return %c0_i32, %c0_i32_0 : i32, i32
  }
  func.func @transform_1(%arg0: i32) -> (i32, i32) {
    %c0_i32 = arith.constant 0 : i32
    %c0_i32_0 = arith.constant 0 : i32
    return %arg0, %c0_i32 : i32, i32
  }
  func.func @transform_2(%arg0: i32) -> (i32, i32) {
    %c0_i32 = arith.constant 0 : i32
    %c0_i32_0 = arith.constant 0 : i32
    return %c0_i32, %arg0 : i32, i32
  }
}

</mosaic_0001>

<llo_original>
// kernel: tpu_custom_call.1
$region0: #{tpu_custom_call.1}
  #allocation0 [shape = 'u32[]', space=smem, size = 0x4, offset = 0x4, fixed_abs, tag = 'smem constant byte address 0x4 - core index']
  #allocation1 [shape = 'u32[72,128]{1,0:T(1,128)}', space=vmem, size = 0x9000, scoped, tag = 'internal scratch']
  %s0 = inlined_call_operand.hbm [shape: f32[8,128], index: 0, kind: input, shape index: {}]
  %s1 = inlined_call_operand.hbm [shape: f32[128,128], index: 1, kind: input, shape index: {}]
  %s2 = inlined_call_operand.hbm [shape: f32[8,128], index: 2, kind: output, shape index: {}]
  %s3 = sld [smem:[#allocation0]]
  $region26: #{tpu_custom_call.1} parent=0
    _
  %s5 = ssub.s32 1, %s3
  %s6 = scalar_select 0, %s5, %s3
  $region1: #{tpu_custom_call.1} parent=0
    #allocation2 [shape = 'u8[4096]{0}', space=vmem, size = 0x1000, scoped, tag = 'input window, operand 0, single buffered']
    #allocation3 [shape = 's32[1]{0}', space=sflag, size = 0x4, scoped, tag = 'scoped memory for tpu_custom_call.1']
    #allocation4 [shape = 's32[1]{0}', space=sflag, size = 0x4, scoped, tag = 'scoped memory for tpu_custom_call.1']
    #allocation5 [shape = 'u8[65536]{0}', space=vmem, size = 0x10000, scoped, tag = 'input window, operand 1, single buffered']
    #allocation6 [shape = 's32[1]{0}', space=sflag, size = 0x4, scoped, tag = 'scoped memory for tpu_custom_call.1']
    #allocation7 [shape = 'u8[4096]{0}', space=vmem, size = 0x1000, scoped, tag = 'output window, operand 0, single buffered']
    %7 = vsyncpa [#allocation3], 0
    %8 = vsyncpa [#allocation6], 0
    %9 = vsyncpa [#allocation4], 0
    // Predicated region
    $region2: #{tpu_custom_call.1} parent=1 // pred_check
      _
    $region3: #{tpu_custom_call.1} parent=1 // pred_check_branch
      %11 = sbr.rel (0) target = $region5
    $region4: #{tpu_custom_call.1} parent=1 // pred_region
      %13 = vsyncadd [#allocation3], 0
      %s15 = sshll.u32 %s0, 4
      %s16 = int_to_ptr.hbm [resolvable:$true] %s15
      %s17 = sshll.u32 [#allocation2], 4
      %s18 = int_to_ptr.vmem [resolvable:$true] %s17
      %20 = dma.hbm_to_vmem [thread:$0]  %s16, 128, %s18, [#allocation3]
    $region5: #{tpu_custom_call.1} parent=1 // pred_fallthru
      _
    // Predicated region
    $region6: #{tpu_custom_call.1} parent=1 // pred_check
      _
    $region7: #{tpu_custom_call.1} parent=1 // pred_check_branch
      %22 = sbr.rel (0) target = $region9
    $region8: #{tpu_custom_call.1} parent=1 // pred_region
      %24 = vsyncadd [#allocation6], 0
      %s25 = sshll.u32 %s1, 4
      %s26 = int_to_ptr.hbm [resolvable:$true] %s25
      %s27 = sshll.u32 [#allocation5], 4
      %s28 = int_to_ptr.vmem [resolvable:$true] %s27
      %33 = dma.hbm_to_vmem [thread:$0]  %s26, 2048, %s28, [#allocation6], 128, 128, 8
    $region9: #{tpu_custom_call.1} parent=1 // pred_fallthru
      _
    // Predicated region
    $region10: #{tpu_custom_call.1} parent=1 // pred_check
      _
    $region11: #{tpu_custom_call.1} parent=1 // pred_check_branch
      %35 = sbr.rel (0) target = $region13
    $region12: #{tpu_custom_call.1} parent=1 // pred_region
      %37 = dma.done [#allocation3], 128
    $region13: #{tpu_custom_call.1} parent=1 // pred_fallthru
      _
    // Predicated region
    $region14: #{tpu_custom_call.1} parent=1 // pred_check
      _
    $region15: #{tpu_custom_call.1} parent=1 // pred_check_branch
      %39 = sbr.rel (0) target = $region17
    $region16: #{tpu_custom_call.1} parent=1 // pred_region
      %41 = dma.done [#allocation6], 2048
    $region17: #{tpu_custom_call.1} parent=1 // pred_fallthru
      _
    %v42 = vld [vmem:[#allocation2] sm:$0xff]
    %v43 = vld [vmem:[#allocation5] sm:$0xff]
    %v44 = vld [vmem:[#allocation5 + $0x8] sm:$0xff]
    %v45 = vld [vmem:[#allocation5 + $0x10] sm:$0xff]
    %v46 = vld [vmem:[#allocation5 + $0x18] sm:$0xff]
    %v47 = vld [vmem:[#allocation5 + $0x20] sm:$0xff]
    %v48 = vld [vmem:[#allocation5 + $0x28] sm:$0xff]
    %v49 = vld [vmem:[#allocation5 + $0x30] sm:$0xff]
    %v50 = vld [vmem:[#allocation5 + $0x38] sm:$0xff]
    %v51 = vld [vmem:[#allocation5 + $0x40] sm:$0xff]
    %v52 = vld [vmem:[#allocation5 + $0x48] sm:$0xff]
    %v53 = vld [vmem:[#allocation5 + $0x50] sm:$0xff]
    %v54 = vld [vmem:[#allocation5 + $0x58] sm:$0xff]
    %v55 = vld [vmem:[#allocation5 + $0x60] sm:$0xff]
    %v56 = vld [vmem:[#allocation5 + $0x68] sm:$0xff]
    %v57 = vld [vmem:[#allocation5 + $0x70] sm:$0xff]
    %v58 = vld [vmem:[#allocation5 + $0x78] sm:$0xff]
    %59 = vmatpush.xpose.msra.mxu0 %v58
    %60 = vmatpush.xpose.msra.mxu0 %v57
    %61 = vmatpush.xpose.msra.mxu0 %v56
    %62 = vmatpush.xpose.msra.mxu0 %v55
    %63 = vmatpush.xpose.msra.mxu0 %v54
    %64 = vmatpush.xpose.msra.mxu0 %v53
    %65 = vmatpush.xpose.msra.mxu0 %v52
    %66 = vmatpush.xpose.msra.mxu0 %v51
    %67 = vmatpush.xpose.msra.mxu0 %v50
    %68 = vmatpush.xpose.msra.mxu0 %v49
    %69 = vmatpush.xpose.msra.mxu0 %v48
    %70 = vmatpush.xpose.msra.mxu0 %v47
    %71 = vmatpush.xpose.msra.mxu0 %v46
    %72 = vmatpush.xpose.msra.mxu0 %v45
    %73 = vmatpush.xpose.msra.mxu0 %v44
    %74 = vmatpush.xpose.msra.mxu0 %v43
    %75 = vmatmul.f32.gmra.mxu0 %v42
    %v76 = vpop.f32.mrf.mxu0
    %v77 = vadd.f32 0.0, %v76
    %78 = vdwg.mxu0
    %v79 = vtanh.pop %v77
    %80 = vst [vmem:[#allocation7] sm:$0xff] %v79
    // Predicated region
    $region18: #{tpu_custom_call.1} parent=1 // pred_check
      _
    $region19: #{tpu_custom_call.1} parent=1 // pred_check_branch
      %82 = sbr.rel (0) target = $region21
    $region20: #{tpu_custom_call.1} parent=1 // pred_region
      %84 = vsyncadd [#allocation4], 0
      %s86 = sshll.u32 [#allocation7], 4
      %s87 = int_to_ptr.vmem [resolvable:$true] %s86
      %s88 = sshll.u32 %s2, 4
      %s89 = int_to_ptr.hbm [resolvable:$true] %s88
      %91 = dma.vmem_to_hbm [thread:$0]  %s87, 128, %s89, [#allocation4]
    $region21: #{tpu_custom_call.1} parent=1 // pred_fallthru
      _
    // Predicated region
    $region22: #{tpu_custom_call.1} parent=1 // pred_check
      _
    $region23: #{tpu_custom_call.1} parent=1 // pred_check_branch
      %93 = sbr.rel (0) target = $region25
    $region24: #{tpu_custom_call.1} parent=1 // pred_region
      %95 = dma.done [#allocation4], 128
    $region25: #{tpu_custom_call.1} parent=1 // pred_fallthru
      _
    %96 = vsyncpa [#allocation3], 1
    %97 = vsyncpa [#allocation6], 1
    %98 = vsyncpa [#allocation4], 1

</llo_original>
